<compile_context>
chip_gen: v5e
topology: v5e:2x2
jax: 0.10.0
libtpu: 0.0.40
codegen_flags: <defaults>
</compile_context>

<pallas_src>
import functools

import jax
import jax.numpy as jnp
from jax.experimental import pallas as pl
from jax.experimental.pallas import tpu as pltpu

_LANE = 128   # lane width (last dim)


def _round_up(v, m):
    return -(-v // m) * m


def _make_rnn_fc_kernel(num_layers: int):
    """Kernel refs: x_tile, (W_l, b_l) * num_layers, W_fc, b_fc, out_tile."""

    def kernel(*refs):
        x_ref = refs[0]
        h = x_ref[...]                                   # bf16 activations
        idx = 1
        # Unrolled RNN layer stack (seq_len == 1, zero initial hidden state;
        # b_hh is folded into the layer bias by prepare_params).
        for _ in range(num_layers):
            w_ref = refs[idx]
            b_ref = refs[idx + 1]
            idx += 2
            # bf16 x bf16 MXU matmul, f32 accumulation; bias add (VPU) and
            # tanh (EUP) in f32, then back to bf16 for the next layer.
            acc = jnp.dot(h, w_ref[...], preferred_element_type=jnp.float32)
            h = jnp.tanh(acc + b_ref[...]).astype(jnp.bfloat16)
        # TODO(synk): dropout is identity here (p=0 / eval); no RNG path emitted.
        wfc_ref = refs[idx]
        bfc_ref = refs[idx + 1]
        out_ref = refs[idx + 2]
        out_ref[...] = (
            jnp.dot(h, wfc_ref[...], preferred_element_type=jnp.float32)
            + bfc_ref[...]
        )

    return kernel


def prepare_params(w_ih_list, b_ih_list, b_hh_list, w_fc, b_fc):
    """One-time parameter preparation (run once, outside the hot path).

    Inputs use PyTorch layouts:
      w_ih_list[l]: (hidden, in_l)   b_ih_list[l], b_hh_list[l]: (hidden,)
      w_fc: (output, hidden)         b_fc: (output,)
    Returns lane-padded, kernel-layout params (bf16 weights, f32 biases).
    """
    num_layers = len(w_ih_list)
    hidden = w_ih_list[0].shape[0]
    out_dim = w_fc.shape[0]
    hid_p = _round_up(hidden, _LANE)
    out_p = _round_up(out_dim, _LANE)

    ws, bs = [], []
    for l in range(num_layers):
        w = jnp.transpose(w_ih_list[l])                      # (in_l, hidden)
        in_l = w.shape[0]
        in_lp = _round_up(in_l, _LANE)
        w_p = jnp.zeros((in_lp, hid_p), jnp.bfloat16).at[:in_l, :hidden].set(
            w.astype(jnp.bfloat16))
        b = (b_ih_list[l] + b_hh_list[l]).reshape(1, hidden).astype(jnp.float32)
        b_p = jnp.zeros((1, hid_p), jnp.float32).at[:, :hidden].set(b)
        ws.append(w_p)
        bs.append(b_p)

    wfc_p = jnp.zeros((hid_p, out_p), jnp.bfloat16).at[:hidden, :out_dim].set(
        jnp.transpose(w_fc).astype(jnp.bfloat16))
    bfc_p = jnp.zeros((1, out_p), jnp.float32).at[:, :out_dim].set(
        b_fc.reshape(1, out_dim).astype(jnp.float32))

    return {
        "layer_ws": tuple(ws),
        "layer_bs": tuple(bs),
        "w_fc": wfc_p,
        "b_fc": bfc_p,
        "out_dim": out_dim,
    }


@functools.partial(jax.jit, static_argnames=("out_dim", "block_m"))
def _forward_impl(x, layer_ws, layer_bs, w_fc_p, b_fc_p, *, out_dim,
                  block_m=256):
    num_layers = len(layer_ws)
    batch, in_dim = x.shape
    in_p = layer_ws[0].shape[0]
    hid_p = layer_ws[0].shape[1]
    out_p = w_fc_p.shape[1]

    # x: bf16 cast + feature-pad fused into one pass; batch dim untouched.
    x_bf = x.astype(jnp.bfloat16)
    if in_p != in_dim:
        x_bf = jnp.pad(x_bf, ((0, 0), (0, in_p - in_dim)))

    # Batch tile: full-batch single block for tiny batches (block dim == array
    # dim, always legal); otherwise a bf16-friendly multiple of 16 chosen so
    # the grid has >= 2 steps (v7x megacore), capped at block_m.
    if batch < 32:
        tm = batch
    else:
        tm = min(block_m, _round_up(pl.cdiv(batch, 2), 16))
    grid = (pl.cdiv(batch, tm),)

    # Inputs + BlockSpecs: x tiled over the batch grid; every parameter uses a
    # constant index_map (VMEM-resident) and is single-buffered.
    resident = pl.Buffered(1)
    inputs = [x_bf]
    in_specs = [pl.BlockSpec((tm, in_p), lambda i: (i, 0))]
    for w_p, b_p in zip(layer_ws, layer_bs):
        inputs += [w_p, b_p]
        in_specs += [
            pl.BlockSpec(w_p.shape, lambda i: (0, 0), pipeline_mode=resident),
            pl.BlockSpec(b_p.shape, lambda i: (0, 0), pipeline_mode=resident),
        ]
    inputs += [w_fc_p, b_fc_p]
    in_specs += [
        pl.BlockSpec(w_fc_p.shape, lambda i: (0, 0), pipeline_mode=resident),
        pl.BlockSpec(b_fc_p.shape, lambda i: (0, 0), pipeline_mode=resident),
    ]
    out_specs = pl.BlockSpec((tm, out_p), lambda i: (i, 0))

    # Explicit VMEM budget: single-buffered params + double/triple-buffered
    # activation tiles + generous headroom, capped under v7x's 64 MiB/TC.
    param_bytes = sum(int(a.size) * a.dtype.itemsize for a in inputs[1:])
    x_tile_bytes = tm * in_p * 2
    out_tile_bytes = tm * out_p * 4
    vmem_needed = param_bytes + 3 * x_tile_bytes + 2 * out_tile_bytes
    vmem_limit = min(64 * 1024 * 1024, vmem_needed + 16 * 1024 * 1024)

    # Advisory cost estimate (bf16 x streamed once, weights read once).
    flops = 2 * batch * (in_p * hid_p
                         + (num_layers - 1) * hid_p * hid_p
                         + hid_p * out_p)
    bytes_accessed = batch * in_p * 2 + batch * out_p * 4 + param_bytes
    cost = pl.CostEstimate(flops=flops,
                           transcendentals=num_layers * batch * hid_p,
                           bytes_accessed=bytes_accessed)

    out_padded = pl.pallas_call(
        _make_rnn_fc_kernel(num_layers),
        out_shape=jax.ShapeDtypeStruct((batch, out_p), jnp.float32),
        grid=grid,
        in_specs=in_specs,
        out_specs=out_specs,
        compiler_params=pltpu.CompilerParams(
            dimension_semantics=("parallel",),
            vmem_limit_bytes=vmem_limit),
        cost_estimate=cost,
    )(*inputs)

    # Slice away the lane padding of the output (batch dim was never padded;
    # the partial trailing block's extra rows are masked by Pallas).
    return out_padded[:, :out_dim]


def rnn_text_classifier_forward(x, params, *, block_m=256):
    """Forward pass. `params` comes from prepare_params() (one-time)."""
    return _forward_impl(x, params["layer_ws"], params["layer_bs"],
                         params["w_fc"], params["b_fc"],
                         out_dim=params["out_dim"], block_m=block_m)


# ----------------------------- reference & test -----------------------------

def _reference_forward(x, w_ih_list, b_ih_list, b_hh_list, w_fc, b_fc):
    h = x.astype(jnp.float32)
    for w_ih, b_ih, b_hh in zip(w_ih_list, b_ih_list, b_hh_list):
        h = jnp.tanh(h @ jnp.transpose(w_ih) + b_ih + b_hh)
    return h @ jnp.transpose(w_fc) + b_fc


def _make_torch_style_params(key, input_size, hidden_size, num_layers,
                             output_size):
    keys = jax.random.split(key, 3 * num_layers + 2)
    scale = 1.0 / (hidden_size ** 0.5)
    w_ih, b_ih, b_hh = [], [], []
    in_dim = input_size
    k = 0
    for _ in range(num_layers):
        w_ih.append(jax.random.uniform(keys[k], (hidden_size, in_dim),
                                       minval=-scale, maxval=scale,
                                       dtype=jnp.float32)); k += 1
        b_ih.append(jax.random.uniform(keys[k], (hidden_size,),
                                       minval=-scale, maxval=scale,
                                       dtype=jnp.float32)); k += 1
        b_hh.append(jax.random.uniform(keys[k], (hidden_size,),
                                       minval=-scale, maxval=scale,
                                       dtype=jnp.float32)); k += 1
        in_dim = hidden_size
    w_fc = jax.random.uniform(keys[k], (output_size, hidden_size),
                              minval=-scale, maxval=scale,
                              dtype=jnp.float32); k += 1
    b_fc = jax.random.uniform(keys[k], (output_size,),
                              minval=-scale, maxval=scale, dtype=jnp.float32)
    return w_ih, b_ih, b_hh, w_fc, b_fc


if __name__ == "__main__":
    # Small shapes consistent with the module's forward.
    input_size = 16
    hidden_size = 32
    num_layers = 2
    output_size = 4

    key = jax.random.PRNGKey(0)
    pkey, xkey1, xkey2 = jax.random.split(key, 3)
    w_ih, b_ih, b_hh, w_fc, b_fc = _make_torch_style_params(
        pkey, input_size, hidden_size, num_layers, output_size)

    # One-time parameter preparation (hoisted out of the jitted forward).
    params = prepare_params(w_ih, b_ih, b_hh, w_fc, b_fc)

    # Case 1: tiny batch (single full-batch block).
    x_small = jax.random.normal(xkey1, (2, input_size), dtype=jnp.float32)
    out_small = jax.block_until_ready(
        rnn_text_classifier_forward(x_small, params))
    ref_small = _reference_forward(x_small, w_ih, b_ih, b_hh, w_fc, b_fc)
    assert out_small.shape == (2, output_size)
    assert jnp.allclose(out_small, ref_small, atol=2e-2, rtol=2e-2), \
        "mismatch vs reference (small batch)"

    # Case 2: larger batch exercising the batch grid (2 tiles of 160 rows,
    # the second one partial: 300 rows total, trailing rows masked).
    x_big = jax.random.normal(xkey2, (300, input_size), dtype=jnp.float32)
    out_big = jax.block_until_ready(
        rnn_text_classifier_forward(x_big, params))
    ref_big = _reference_forward(x_big, w_ih, b_ih, b_hh, w_fc, b_fc)
    assert out_big.shape == (300, output_size)
    assert jnp.allclose(out_big, ref_big, atol=2e-2, rtol=2e-2), \
        "mismatch vs reference (large batch)"

    print("KERNEL_OK")
</pallas_src>

<mosaic_0001>
module attributes {stable_mosaic.version = 11 : i64} {
  func.func @kernel(%arg0: i32, %arg1: memref<2x128xbf16, #tpu.memory_space<vmem>>, %arg2: memref<128x128xbf16, #tpu.memory_space<vmem>>, %arg3: memref<1x128xf32, #tpu.memory_space<vmem>>, %arg4: memref<128x128xbf16, #tpu.memory_space<vmem>>, %arg5: memref<1x128xf32, #tpu.memory_space<vmem>>, %arg6: memref<128x128xbf16, #tpu.memory_space<vmem>>, %arg7: memref<1x128xf32, #tpu.memory_space<vmem>>, %arg8: memref<2x128xf32, #tpu.memory_space<vmem>>) attributes {dimension_semantics = [#tpu.dimension_semantics<parallel>], iteration_bounds = array<i64: 1>, scalar_prefetch = 0 : i64, scratch_operands = 0 : i64, tpu.core_type = #tpu.core_type<tc>, window_params = [{transform_indices = @transform_0, window_bounds = array<i64: 2, 128>}, {pipeline_mode = #tpu.pipeline_mode<synchronous>, transform_indices = @transform_1, window_bounds = array<i64: 128, 128>}, {pipeline_mode = #tpu.pipeline_mode<synchronous>, transform_indices = @transform_2, window_bounds = array<i64: 1, 128>}, {pipeline_mode = #tpu.pipeline_mode<synchronous>, transform_indices = @transform_3, window_bounds = array<i64: 128, 128>}, {pipeline_mode = #tpu.pipeline_mode<synchronous>, transform_indices = @transform_4, window_bounds = array<i64: 1, 128>}, {pipeline_mode = #tpu.pipeline_mode<synchronous>, transform_indices = @transform_5, window_bounds = array<i64: 128, 128>}, {pipeline_mode = #tpu.pipeline_mode<synchronous>, transform_indices = @transform_6, window_bounds = array<i64: 1, 128>}, {transform_indices = @transform_7, window_bounds = array<i64: 2, 128>}]} {
    %c0 = arith.constant 0 : index
    %c0_0 = arith.constant 0 : index
    %0 = vector.load %arg1[%c0, %c0_0] : memref<2x128xbf16, #tpu.memory_space<vmem>>, vector<2x128xbf16>
    %c0_1 = arith.constant 0 : index
    %c0_2 = arith.constant 0 : index
    %1 = vector.load %arg2[%c0_1, %c0_2] : memref<128x128xbf16, #tpu.memory_space<vmem>>, vector<128x128xbf16>
    %cst = arith.constant dense<0.000000e+00> : vector<2x128xf32>
    %2 = tpu.matmul %0, %1, %cst {dimension_numbers = #tpu.dot_dimension_numbers<[1], [0], [0], [1], [0, 0, 1, 1], [], []>} : vector<2x128xbf16>, vector<128x128xbf16>, vector<2x128xf32> -> vector<2x128xf32>
    %c0_3 = arith.constant 0 : index
    %c0_4 = arith.constant 0 : index
    %3 = vector.load %arg3[%c0_3, %c0_4] : memref<1x128xf32, #tpu.memory_space<vmem>>, vector<1x128xf32>
    %4 = vector.broadcast %3 : vector<1x128xf32> to vector<2x128xf32>
    %5 = arith.addf %2, %4 : vector<2x128xf32>
    %6 = math.tanh %5 : vector<2x128xf32>
    %7 = arith.truncf %6 : vector<2x128xf32> to vector<2x128xbf16>
    %c0_5 = arith.constant 0 : index
    %c0_6 = arith.constant 0 : index
    %8 = vector.load %arg4[%c0_5, %c0_6] : memref<128x128xbf16, #tpu.memory_space<vmem>>, vector<128x128xbf16>
    %cst_7 = arith.constant dense<0.000000e+00> : vector<2x128xf32>
    %9 = tpu.matmul %7, %8, %cst_7 {dimension_numbers = #tpu.dot_dimension_numbers<[1], [0], [0], [1], [0, 0, 1, 1], [], []>} : vector<2x128xbf16>, vector<128x128xbf16>, vector<2x128xf32> -> vector<2x128xf32>
    %c0_8 = arith.constant 0 : index
    %c0_9 = arith.constant 0 : index
    %10 = vector.load %arg5[%c0_8, %c0_9] : memref<1x128xf32, #tpu.memory_space<vmem>>, vector<1x128xf32>
    %11 = vector.broadcast %10 : vector<1x128xf32> to vector<2x128xf32>
    %12 = arith.addf %9, %11 : vector<2x128xf32>
    %13 = math.tanh %12 : vector<2x128xf32>
    %14 = arith.truncf %13 : vector<2x128xf32> to vector<2x128xbf16>
    %c0_10 = arith.constant 0 : index
    %c0_11 = arith.constant 0 : index
    %15 = vector.load %arg6[%c0_10, %c0_11] : memref<128x128xbf16, #tpu.memory_space<vmem>>, vector<128x128xbf16>
    %cst_12 = arith.constant dense<0.000000e+00> : vector<2x128xf32>
    %16 = tpu.matmul %14, %15, %cst_12 {dimension_numbers = #tpu.dot_dimension_numbers<[1], [0], [0], [1], [0, 0, 1, 1], [], []>} : vector<2x128xbf16>, vector<128x128xbf16>, vector<2x128xf32> -> vector<2x128xf32>
    %c0_13 = arith.constant 0 : index
    %c0_14 = arith.constant 0 : index
    %17 = vector.load %arg7[%c0_13, %c0_14] : memref<1x128xf32, #tpu.memory_space<vmem>>, vector<1x128xf32>
    %18 = vector.broadcast %17 : vector<1x128xf32> to vector<2x128xf32>
    %19 = arith.addf %16, %18 : vector<2x128xf32>
    %c0_15 = arith.constant 0 : index
    %c0_16 = arith.constant 0 : index
    %20 = vector.load %arg8[%c0_15, %c0_16] : memref<2x128xf32, #tpu.memory_space<vmem>>, vector<2x128xf32>
    tpu.vector_store %arg8[%c0_15, %c0_16], %19 {strides = array<i32>} : memref<2x128xf32, #tpu.memory_space<vmem>>, vector<2x128xf32>,
    return
  }
  func.func @transform_0(%arg0: i32) -> (i32, i32) {
    %c0_i32 = arith.constant 0 : i32
    %c0_i32_0 = arith.constant 0 : i32
    return %arg0, %c0_i32 : i32, i32
  }
  func.func @transform_1(%arg0: i32) -> (i32, i32) {
    %c0_i32 = arith.constant 0 : i32
    %c0_i32_0 = arith.constant 0 : i32
    %c0_i32_1 = arith.constant 0 : i32
    return %c0_i32, %c0_i32_0 : i32, i32
  }
  func.func @transform_2(%arg0: i32) -> (i32, i32) {
    %c0_i32 = arith.constant 0 : i32
    %c0_i32_0 = arith.constant 0 : i32
    %c0_i32_1 = arith.constant 0 : i32
    return %c0_i32, %c0_i32_0 : i32, i32
  }
  func.func @transform_3(%arg0: i32) -> (i32, i32) {
    %c0_i32 = arith.constant 0 : i32
    %c0_i32_0 = arith.constant 0 : i32
    %c0_i32_1 = arith.constant 0 : i32
    return %c0_i32, %c0_i32_0 : i32, i32
  }
  func.func @transform_4(%arg0: i32) -> (i32, i32) {
    %c0_i32 = arith.constant 0 : i32
    %c0_i32_0 = arith.constant 0 : i32
    %c0_i32_1 = arith.constant 0 : i32
    return %c0_i32, %c0_i32_0 : i32, i32
  }
  func.func @transform_5(%arg0: i32) -> (i32, i32) {
    %c0_i32 = arith.constant 0 : i32
    %c0_i32_0 = arith.constant 0 : i32
    %c0_i32_1 = arith.constant 0 : i32
    return %c0_i32, %c0_i32_0 : i32, i32
  }
  func.func @transform_6(%arg0: i32) -> (i32, i32) {
    %c0_i32 = arith.constant 0 : i32
    %c0_i32_0 = arith.constant 0 : i32
    %c0_i32_1 = arith.constant 0 : i32
    return %c0_i32, %c0_i32_0 : i32, i32
  }
  func.func @transform_7(%arg0: i32) -> (i32, i32) {
    %c0_i32 = arith.constant 0 : i32
    %c0_i32_0 = arith.constant 0 : i32
    return %arg0, %c0_i32 : i32, i32
  }
}

</mosaic_0001>

<llo_original>
// kernel: _forward_impl.1
$region0: #{_forward_impl.1}
  #allocation0 [shape = 'u32[]', space=smem, size = 0x4, offset = 0x4, fixed_abs, tag = 'smem constant byte address 0x4 - core index']
  #allocation1 [shape = 'u32[72,128]{1,0:T(1,128)}', space=vmem, size = 0x9000, scoped, tag = 'internal scratch']
  %s0 = inlined_call_operand.vmem [shape: bf16[2,128], index: 0, kind: input, shape index: {}]
  %s1 = inlined_call_operand.hbm [shape: bf16[128,128], index: 1, kind: input, shape index: {}]
  %s2 = inlined_call_operand.vmem [shape: f32[1,128], index: 2, kind: input, shape index: {}]
  %s3 = inlined_call_operand.hbm [shape: bf16[128,128], index: 3, kind: input, shape index: {}]
  %s4 = inlined_call_operand.vmem [shape: f32[1,128], index: 4, kind: input, shape index: {}]
  %s5 = inlined_call_operand.hbm [shape: bf16[128,128], index: 5, kind: input, shape index: {}]
  %s6 = inlined_call_operand.vmem [shape: f32[1,128], index: 6, kind: input, shape index: {}]
  %s7 = inlined_call_operand.hbm [shape: f32[2,128], index: 7, kind: output, shape index: {}]
  %s8 = sld [smem:[#allocation0]]
  $region50: #{_forward_impl.1} parent=0
    _
  %s10 = ssub.s32 1, %s8
  %s11 = scalar_select 0, %s10, %s8
  $region1: #{_forward_impl.1} parent=0
    #allocation2 [shape = 'u8[32768]{0}', space=vmem, size = 0x8000, scoped, tag = 'input window, operand 1, single buffered']
    #allocation3 [shape = 's32[1]{0}', space=sflag, size = 0x4, scoped, tag = 'scoped memory for _forward_impl.1']
    #allocation4 [shape = 's32[1]{0}', space=sflag, size = 0x4, scoped, tag = 'scoped memory for _forward_impl.1']
    #allocation5 [shape = 'u8[32768]{0}', space=vmem, size = 0x8000, scoped, tag = 'input window, operand 3, single buffered']
    #allocation6 [shape = 's32[1]{0}', space=sflag, size = 0x4, scoped, tag = 'scoped memory for _forward_impl.1']
    #allocation7 [shape = 'u8[32768]{0}', space=vmem, size = 0x8000, scoped, tag = 'input window, operand 5, single buffered']
    #allocation8 [shape = 'u8[1024]{0}', space=vmem, size = 0x400, scoped, tag = 'output window, operand 0, single buffered']
    %12 = vsyncpa [#allocation3], 0
    %13 = vsyncpa [#allocation6], 0
    %14 = vsyncpa [#allocation4], 0
    // Predicated region
    $region2: #{_forward_impl.1} parent=1 // pred_check
      _
    $region3: #{_forward_impl.1} parent=1 // pred_check_branch
      %16 = sbr.rel (0) target = $region5
    $region4: #{_forward_impl.1} parent=1 // pred_region
      _
    $region5: #{_forward_impl.1} parent=1 // pred_fallthru
      _
    // Predicated region
    $region6: #{_forward_impl.1} parent=1 // pred_check
      _
    $region7: #{_forward_impl.1} parent=1 // pred_check_branch
      %18 = sbr.rel (0) target = $region9
    $region8: #{_forward_impl.1} parent=1 // pred_region
      %20 = vsyncadd [#allocation3], 0
      %s21 = sshll.u32 %s1, 4
      %s22 = int_to_ptr.hbm [resolvable:$true] %s21
      %s23 = sshll.u32 [#allocation2], 4
      %s24 = int_to_ptr.vmem [resolvable:$true] %s23
      %29 = dma.hbm_to_vmem [thread:$0]  %s22, 1024, %s24, [#allocation3], 64, 64, 4
    $region9: #{_forward_impl.1} parent=1 // pred_fallthru
      _
    // Predicated region
    $region10: #{_forward_impl.1} parent=1 // pred_check
      _
    $region11: #{_forward_impl.1} parent=1 // pred_check_branch
      %31 = sbr.rel (0) target = $region13
    $region12: #{_forward_impl.1} parent=1 // pred_region
      _
    $region13: #{_forward_impl.1} parent=1 // pred_fallthru
      _
    // Predicated region
    $region14: #{_forward_impl.1} parent=1 // pred_check
      _
    $region15: #{_forward_impl.1} parent=1 // pred_check_branch
      %33 = sbr.rel (0) target = $region17
    $region16: #{_forward_impl.1} parent=1 // pred_region
      %35 = vsyncadd [#allocation6], 0
      %s36 = sshll.u32 %s3, 4
      %s37 = int_to_ptr.hbm [resolvable:$true] %s36
      %s38 = sshll.u32 [#allocation5], 4
      %s39 = int_to_ptr.vmem [resolvable:$true] %s38
      %44 = dma.hbm_to_vmem [thread:$0]  %s37, 1024, %s39, [#allocation6], 64, 64, 4
    $region17: #{_forward_impl.1} parent=1 // pred_fallthru
      _
    // Predicated region
    $region18: #{_forward_impl.1} parent=1 // pred_check
      _
    $region19: #{_forward_impl.1} parent=1 // pred_check_branch
      %46 = sbr.rel (0) target = $region21
    $region20: #{_forward_impl.1} parent=1 // pred_region
      _
    $region21: #{_forward_impl.1} parent=1 // pred_fallthru
      _
    // Predicated region
    $region22: #{_forward_impl.1} parent=1 // pred_check
      _
    $region23: #{_forward_impl.1} parent=1 // pred_check_branch
      %48 = sbr.rel (0) target = $region25
    $region24: #{_forward_impl.1} parent=1 // pred_region
      %50 = vsyncadd [#allocation6], 0
      %s51 = sshll.u32 %s5, 4
      %s52 = int_to_ptr.hbm [resolvable:$true] %s51
      %s53 = sshll.u32 [#allocation7], 4
      %s54 = int_to_ptr.vmem [resolvable:$true] %s53
      %59 = dma.hbm_to_vmem [thread:$0]  %s52, 1024, %s54, [#allocation6], 64, 64, 4
    $region25: #{_forward_impl.1} parent=1 // pred_fallthru
      _
    // Predicated region
    $region26: #{_forward_impl.1} parent=1 // pred_check
      _
    $region27: #{_forward_impl.1} parent=1 // pred_check_branch
      %61 = sbr.rel (0) target = $region29
    $region28: #{_forward_impl.1} parent=1 // pred_region
      _
    $region29: #{_forward_impl.1} parent=1 // pred_fallthru
      _
    // Predicated region
    $region30: #{_forward_impl.1} parent=1 // pred_check
      _
    $region31: #{_forward_impl.1} parent=1 // pred_check_branch
      %63 = sbr.rel (0) target = $region33
    $region32: #{_forward_impl.1} parent=1 // pred_region
      %65 = dma.done [#allocation3], 1024
    $region33: #{_forward_impl.1} parent=1 // pred_fallthru
      _
    // Predicated region
    $region34: #{_forward_impl.1} parent=1 // pred_check
      _
    $region35: #{_forward_impl.1} parent=1 // pred_check_branch
      %67 = sbr.rel (0) target = $region37
    $region36: #{_forward_impl.1} parent=1 // pred_region
      %69 = dma.done [#allocation6], 1024
    $region37: #{_forward_impl.1} parent=1 // pred_fallthru
      _
    // Predicated region
    $region38: #{_forward_impl.1} parent=1 // pred_check
      _
    $region39: #{_forward_impl.1} parent=1 // pred_check_branch
      %71 = sbr.rel (0) target = $region41
    $region40: #{_forward_impl.1} parent=1 // pred_region
      %73 = dma.done [#allocation6], 1024
    $region41: #{_forward_impl.1} parent=1 // pred_fallthru
      _
    %v74 = vld [vmem:[%s0] sm:$0x1]
    %v75 = vld [vmem:[#allocation2] sm:$0xf]
    %v76 = vld [vmem:[#allocation2 + $0x4] sm:$0xf]
    %v77 = vld [vmem:[#allocation2 + $0x8] sm:$0xf]
    %v78 = vld [vmem:[#allocation2 + $0xc] sm:$0xf]
    %v79 = vld [vmem:[#allocation2 + $0x10] sm:$0xf]
    %v80 = vld [vmem:[#allocation2 + $0x14] sm:$0xf]
    %v81 = vld [vmem:[#allocation2 + $0x18] sm:$0xf]
    %v82 = vld [vmem:[#allocation2 + $0x1c] sm:$0xf]
    %v83 = vld [vmem:[#allocation2 + $0x20] sm:$0xf]
    %v84 = vld [vmem:[#allocation2 + $0x24] sm:$0xf]
    %v85 = vld [vmem:[#allocation2 + $0x28] sm:$0xf]
    %v86 = vld [vmem:[#allocation2 + $0x2c] sm:$0xf]
    %v87 = vld [vmem:[#allocation2 + $0x30] sm:$0xf]
    %v88 = vld [vmem:[#allocation2 + $0x34] sm:$0xf]
    %v89 = vld [vmem:[#allocation2 + $0x38] sm:$0xf]
    %v90 = vld [vmem:[#allocation2 + $0x3c] sm:$0xf]
    %v91 = vld [vmem:[%s2] sm:$0x1]
    %v93 = vperm.slane %v91, 0
    %v111 = vunpack.c.l.b16 %v75
    %v112 = vunpack.c.l.b16 %v76
    %v113 = vunpack.c.l.b16 %v77
    %v114 = vunpack.c.l.b16 %v78
    %v115 = vunpack.c.l.b16 %v79
    %v116 = vunpack.c.l.b16 %v80
    %v117 = vunpack.c.l.b16 %v81
    %v118 = vunpack.c.l.b16 %v82
    %v119 = vunpack.c.l.b16 %v83
    %v120 = vunpack.c.l.b16 %v84
    %v121 = vunpack.c.l.b16 %v85
    %v122 = vunpack.c.l.b16 %v86
    %v123 = vunpack.c.l.b16 %v87
    %v124 = vunpack.c.l.b16 %v88
    %v125 = vunpack.c.l.b16 %v89
    %v126 = vunpack.c.l.b16 %v90
    %v127 = vpack.c.b16 %v112, %v111
    %v128 = vpack.c.b16 %v114, %v113
    %v129 = vpack.c.b16 %v116, %v115
    %v130 = vpack.c.b16 %v118, %v117
    %v131 = vpack.c.b16 %v120, %v119
    %v132 = vpack.c.b16 %v122, %v121
    %v133 = vpack.c.b16 %v124, %v123
    %v134 = vpack.c.b16 %v126, %v125
    %143 = vmatpush.bf16.msra.mxu0 %v134
    %144 = vmatpush.bf16.msra.mxu0 %v133
    %145 = vmatpush.bf16.msra.mxu0 %v132
    %146 = vmatpush.bf16.msra.mxu0 %v131
    %147 = vmatpush.bf16.msra.mxu0 %v130
    %148 = vmatpush.bf16.msra.mxu0 %v129
    %149 = vmatpush.bf16.msra.mxu0 %v128
    %150 = vmatpush.bf16.msra.mxu0 %v127
    %151 = vmatmul.bf16.gmra.mxu0 %v74
    %v152 = vpop.f32.mrf.mxu0
    %v153 = vadd.f32 %v93, %v152
    %v154 = vpop.f32.mrf.mxu0
    %155 = vdwg.mxu0
    %v156 = vtanh.pop %v153
    %v157 = vpack.c.bf16 %v156, %v156
    %v158 = vld [vmem:[#allocation5] sm:$0xf]
    %v159 = vld [vmem:[#allocation5 + $0x4] sm:$0xf]
    %v160 = vld [vmem:[#allocation5 + $0x8] sm:$0xf]
    %v161 = vld [vmem:[#allocation5 + $0xc] sm:$0xf]
    %v162 = vld [vmem:[#allocation5 + $0x10] sm:$0xf]
    %v163 = vld [vmem:[#allocation5 + $0x14] sm:$0xf]
    %v164 = vld [vmem:[#allocation5 + $0x18] sm:$0xf]
    %v165 = vld [vmem:[#allocation5 + $0x1c] sm:$0xf]
    %v166 = vld [vmem:[#allocation5 + $0x20] sm:$0xf]
    %v167 = vld [vmem:[#allocation5 + $0x24] sm:$0xf]
    %v168 = vld [vmem:[#allocation5 + $0x28] sm:$0xf]
    %v169 = vld [vmem:[#allocation5 + $0x2c] sm:$0xf]
    %v170 = vld [vmem:[#allocation5 + $0x30] sm:$0xf]
    %v171 = vld [vmem:[#allocation5 + $0x34] sm:$0xf]
    %v172 = vld [vmem:[#allocation5 + $0x38] sm:$0xf]
    %v173 = vld [vmem:[#allocation5 + $0x3c] sm:$0xf]
    %v174 = vld [vmem:[%s4] sm:$0x1]
    %v176 = vperm.slane %v174, 0
    %v194 = vunpack.c.l.b16 %v158
    %v195 = vunpack.c.l.b16 %v159
    %v196 = vunpack.c.l.b16 %v160
    %v197 = vunpack.c.l.b16 %v161
    %v198 = vunpack.c.l.b16 %v162
    %v199 = vunpack.c.l.b16 %v163
    %v200 = vunpack.c.l.b16 %v164
    %v201 = vunpack.c.l.b16 %v165
    %v202 = vunpack.c.l.b16 %v166
    %v203 = vunpack.c.l.b16 %v167
    %v204 = vunpack.c.l.b16 %v168
    %v205 = vunpack.c.l.b16 %v169
    %v206 = vunpack.c.l.b16 %v170
    %v207 = vunpack.c.l.b16 %v171
    %v208 = vunpack.c.l.b16 %v172
    %v209 = vunpack.c.l.b16 %v173
    %v210 = vpack.c.b16 %v195, %v194
    %v211 = vpack.c.b16 %v197, %v196
    %v212 = vpack.c.b16 %v199, %v198
    %v213 = vpack.c.b16 %v201, %v200
    %v214 = vpack.c.b16 %v203, %v202
    %v215 = vpack.c.b16 %v205, %v204
    %v216 = vpack.c.b16 %v207, %v206
    %v217 = vpack.c.b16 %v209, %v208
    %226 = vmatpush.bf16.msra.mxu0 %v217
    %227 = vmatpush.bf16.msra.mxu0 %v216
    %228 = vmatpush.bf16.msra.mxu0 %v215
    %229 = vmatpush.bf16.msra.mxu0 %v214
    %230 = vmatpush.bf16.msra.mxu0 %v213
    %231 = vmatpush.bf16.msra.mxu0 %v212
    %232 = vmatpush.bf16.msra.mxu0 %v211
    %233 = vmatpush.bf16.msra.mxu0 %v210
    %234 = vmatmul.bf16.gmra.mxu0 %v157
    %v235 = vpop.f32.mrf.mxu0
    %v236 = vadd.f32 %v176, %v235
    %v237 = vpop.f32.mrf.mxu0
    %238 = vdwg.mxu0
    %v239 = vtanh.pop %v236
    %v240 = vpack.c.bf16 %v239, %v239
    %v241 = vld [vmem:[#allocation7] sm:$0xf]
    %v242 = vld [vmem:[#allocation7 + $0x4] sm:$0xf]
    %v243 = vld [vmem:[#allocation7 + $0x8] sm:$0xf]
    %v244 = vld [vmem:[#allocation7 + $0xc] sm:$0xf]
    %v245 = vld [vmem:[#allocation7 + $0x10] sm:$0xf]
    %v246 = vld [vmem:[#allocation7 + $0x14] sm:$0xf]
    %v247 = vld [vmem:[#allocation7 + $0x18] sm:$0xf]
    %v248 = vld [vmem:[#allocation7 + $0x1c] sm:$0xf]
    %v249 = vld [vmem:[#allocation7 + $0x20] sm:$0xf]
    %v250 = vld [vmem:[#allocation7 + $0x24] sm:$0xf]
    %v251 = vld [vmem:[#allocation7 + $0x28] sm:$0xf]
    %v252 = vld [vmem:[#allocation7 + $0x2c] sm:$0xf]
    %v253 = vld [vmem:[#allocation7 + $0x30] sm:$0xf]
    %v254 = vld [vmem:[#allocation7 + $0x34] sm:$0xf]
    %v255 = vld [vmem:[#allocation7 + $0x38] sm:$0xf]
    %v256 = vld [vmem:[#allocation7 + $0x3c] sm:$0xf]
    %v257 = vld [vmem:[%s6] sm:$0x1]
    %v259 = vperm.slane %v257, 0
    %v277 = vunpack.c.l.b16 %v241
    %v278 = vunpack.c.l.b16 %v242
    %v279 = vunpack.c.l.b16 %v243
    %v280 = vunpack.c.l.b16 %v244
    %v281 = vunpack.c.l.b16 %v245
    %v282 = vunpack.c.l.b16 %v246
    %v283 = vunpack.c.l.b16 %v247
    %v284 = vunpack.c.l.b16 %v248
    %v285 = vunpack.c.l.b16 %v249
    %v286 = vunpack.c.l.b16 %v250
    %v287 = vunpack.c.l.b16 %v251
    %v288 = vunpack.c.l.b16 %v252
    %v289 = vunpack.c.l.b16 %v253
    %v290 = vunpack.c.l.b16 %v254
    %v291 = vunpack.c.l.b16 %v255
    %v292 = vunpack.c.l.b16 %v256
    %v293 = vpack.c.b16 %v278, %v277
    %v294 = vpack.c.b16 %v280, %v279
    %v295 = vpack.c.b16 %v282, %v281
    %v296 = vpack.c.b16 %v284, %v283
    %v297 = vpack.c.b16 %v286, %v285
    %v298 = vpack.c.b16 %v288, %v287
    %v299 = vpack.c.b16 %v290, %v289
    %v300 = vpack.c.b16 %v292, %v291
    %309 = vmatpush.bf16.msra.mxu0 %v300
    %310 = vmatpush.bf16.msra.mxu0 %v299
    %311 = vmatpush.bf16.msra.mxu0 %v298
    %312 = vmatpush.bf16.msra.mxu0 %v297
    %313 = vmatpush.bf16.msra.mxu0 %v296
    %314 = vmatpush.bf16.msra.mxu0 %v295
    %315 = vmatpush.bf16.msra.mxu0 %v294
    %316 = vmatpush.bf16.msra.mxu0 %v293
    %317 = vmatmul.bf16.gmra.mxu0 %v240
    %v318 = vpop.f32.mrf.mxu0
    %v319 = vadd.f32 %v259, %v318
    %v320 = vpop.f32.mrf.mxu0
    %321 = vdwg.mxu0
    %322 = vst [vmem:[#allocation8] sm:$0x3] %v319
    // Predicated region
    $region42: #{_forward_impl.1} parent=1 // pred_check
      _
    $region43: #{_forward_impl.1} parent=1 // pred_check_branch
      %324 = sbr.rel (0) target = $region45
    $region44: #{_forward_impl.1} parent=1 // pred_region
      %326 = vsyncadd [#allocation4], 0
      %s328 = sshll.u32 [#allocation8], 4
      %s329 = int_to_ptr.vmem [resolvable:$true] %s328
      %s330 = sshll.u32 %s7, 4
      %s331 = int_to_ptr.hbm [resolvable:$true] %s330
      %333 = dma.vmem_to_hbm [thread:$0]  %s329, 32, %s331, [#allocation4]
    $region45: #{_forward_impl.1} parent=1 // pred_fallthru
      _
    // Predicated region
    $region46: #{_forward_impl.1} parent=1 // pred_check
      _
    $region47: #{_forward_impl.1} parent=1 // pred_check_branch
      %335 = sbr.rel (0) target = $region49
    $region48: #{_forward_impl.1} parent=1 // pred_region
      %337 = dma.done [#allocation4], 32
    $region49: #{_forward_impl.1} parent=1 // pred_fallthru
      _
    %338 = vsyncpa [#allocation3], 1
    %339 = vsyncpa [#allocation6], 1
    %340 = vsyncpa [#allocation4], 1

</llo_original>
